<compile_context>
chip_gen: v6e
topology: v6e:2x2x1
jax: 0.10.0
libtpu: 0.0.40
codegen_flags: <defaults>
</compile_context>

<pallas_src>
import functools

import jax
import jax.numpy as jnp
from jax.experimental import pallas as pl
from jax.experimental.pallas import tpu as pltpu


# ---------------------------------------------------------------------------
# Kernel
# ---------------------------------------------------------------------------
def _swiglu_kernel(x_ref, wg_ref, wu_ref, wd_ref, o_ref, acc_ref):
    # x_ref:  (tm, dim)  bf16
    # wg_ref: (dim, th)  bf16   gate weight tile
    # wu_ref: (dim, th)  bf16   up weight tile
    # wd_ref: (th, dim)  bf16   down weight tile
    # o_ref:  (tm, dim)  output dtype
    # acc_ref:(tm, dim)  f32 scratch, persists across the hidden grid axis
    h_idx = pl.program_id(1)

    @pl.when(h_idx == 0)
    def _():
        acc_ref[...] = jnp.zeros_like(acc_ref)

    x = x_ref[...]
    g = jnp.dot(x, wg_ref[...], preferred_element_type=jnp.float32)   # (tm, th)
    u = jnp.dot(x, wu_ref[...], preferred_element_type=jnp.float32)   # (tm, th)
    hact = (g * jax.nn.sigmoid(g)) * u                                 # SiLU(g)*u, f32

    acc_ref[...] += jnp.dot(hact.astype(wd_ref.dtype), wd_ref[...],
                            preferred_element_type=jnp.float32)

    @pl.when(h_idx == pl.num_programs(1) - 1)
    def _():
        o_ref[...] = acc_ref[...].astype(o_ref.dtype)


# ---------------------------------------------------------------------------
# Tiling / budget helpers (host-side, trace-time)
# ---------------------------------------------------------------------------
def _round_up(a, b):
    return ((a + b - 1) // b) * b


def _tpu_generation():
    try:
        kind = jax.devices()[0].device_kind.lower()
    except Exception:
        return None
    if "v7" in kind or "7x" in kind:
        return 7
    if "v6" in kind:
        return 6
    if "v5" in kind:
        return 5
    if "v4" in kind:
        return 4
    return None


def _vmem_capacity_bytes():
    try:
        return int(pltpu.get_tpu_info().vmem_capacity_bytes)
    except Exception:
        return 64 << 20  # conservative (v7x-sized) fallback


def _default_tiles(gen):
    """(tm, th_desired, th_align) per generation."""
    if gen == 7:
        return 512, 256, 256   # 64 MiB VMEM: big tm, smaller th
    if gen == 6:
        return 512, 512, 256   # ridge ~650 FLOP/byte -> large tm
    if gen == 5:
        return 256, 512, 128   # already compute-bound at tm=256
    return 256, 512, 128


def _choose_hidden_tile(hidden, desired, align=128):
    """Largest multiple of `align` dividing `hidden`, <= desired (fallback: hidden)."""
    if hidden <= desired:
        return hidden
    t = (desired // align) * align
    while t >= align:
        if hidden % t == 0:
            return t
        t -= align
    return hidden


def _vmem_budget(tm, th, dim, out_itemsize):
    x_tile = tm * dim * 2
    wg_tile = dim * th * 2
    wu_tile = dim * th * 2
    wd_tile = th * dim * 2
    out_tile = tm * dim * out_itemsize
    acc_tile = tm * dim * 4
    # in-kernel intermediates: g,u in f32 (2*tm*th*4) + hact f32 + bf16 (tm*th*6)
    inter = tm * th * 14
    return 2 * (x_tile + wg_tile + wu_tile + wd_tile + out_tile) + acc_tile + inter + (4 << 20)


def _fit_tiles(tm, th, dim, hidden, out_itemsize, cap, th_align):
    """Shrink (th first, then tm) until the VMEM budget fits `cap`."""
    while _vmem_budget(tm, th, dim, out_itemsize) > cap:
        if th > th_align:
            new_th = _choose_hidden_tile(hidden, max(th // 2, th_align), th_align)
            if new_th < th:
                th = new_th
                continue
        if tm > 128:
            tm = max(128, tm // 2)
            continue
        break  # best effort; Mosaic may still spill for extreme dims
    return tm, th


# ---------------------------------------------------------------------------
# Pallas call wrapper
# ---------------------------------------------------------------------------
@functools.partial(jax.jit, static_argnames=("tm", "th", "vmem_limit"))
def _swiglu_pallas(x2d, w_gate, w_up, w_down, tm, th, vmem_limit):
    """x2d: [T, dim] (T % tm == 0). Weights (ideally already bf16): [dim,H], [dim,H], [H,dim]."""
    T, dim = x2d.shape
    hidden = w_gate.shape[1]
    n_t = T // tm
    n_h = hidden // th

    # bf16 operands for the MXU.  These astype calls are no-ops when the weights were
    # prepared once with prepare_swiglu_weights (the intended hot path).
    xb = x2d.astype(jnp.bfloat16)
    wg = w_gate.astype(jnp.bfloat16)
    wu = w_up.astype(jnp.bfloat16)
    wd = w_down.astype(jnp.bfloat16)

    return pl.pallas_call(
        _swiglu_kernel,
        out_shape=jax.ShapeDtypeStruct((T, dim), x2d.dtype),
        grid_spec=pltpu.PrefetchScalarGridSpec(
            num_scalar_prefetch=0,
            grid=(n_t, n_h),
            in_specs=[
                pl.BlockSpec((tm, dim), lambda i, h: (i, 0)),
                pl.BlockSpec((dim, th), lambda i, h: (0, h)),
                pl.BlockSpec((dim, th), lambda i, h: (0, h)),
                pl.BlockSpec((th, dim), lambda i, h: (h, 0)),
            ],
            out_specs=pl.BlockSpec((tm, dim), lambda i, h: (i, 0)),
            scratch_shapes=[pltpu.VMEM((tm, dim), jnp.float32)],
        ),
        compiler_params=pltpu.CompilerParams(
            dimension_semantics=("parallel", "arbitrary"),
            vmem_limit_bytes=vmem_limit,
        ),
    )(xb, wg, wu, wd)


def swiglu_forward(x, w_gate, w_up, w_down, *, tm=None, th=None):
    """x: [..., dim]; returns same shape/dtype. Hot path runs in the Pallas kernel."""
    dim = x.shape[-1]
    hidden = w_gate.shape[1]
    x2d = x.reshape(-1, dim)
    T = x2d.shape[0]

    gen = _tpu_generation()
    d_tm, d_th, th_align = _default_tiles(gen)
    tm_desired = d_tm if tm is None else tm
    th_desired = d_th if th is None else th

    # Hidden tile: largest aligned divisor of hidden <= desired.
    th_eff = _choose_hidden_tile(hidden, th_desired, th_align)
    if th_eff == hidden and hidden > th_desired and th_align > 128:
        th_eff = _choose_hidden_tile(hidden, th_desired, 128)  # retry with finer alignment

    # Fit the desired tiles into the generation's VMEM (capacity minus headroom).
    cap = _vmem_capacity_bytes()
    headroom = (12 << 20) if cap <= (64 << 20) else (16 << 20)
    cap_eff = max(cap - headroom, 16 << 20)
    tm_fit, th_eff = _fit_tiles(tm_desired, th_eff, dim, hidden,
                                x2d.dtype.itemsize, cap_eff, th_align)

    # Token tile: don't blow up tiny inputs; keep a multiple of 16 (bf16 sublane packing).
    tm_eff = min(tm_fit, _round_up(max(T, 1), 16))
    # v7x has 2 TensorCores: make the "parallel" token axis at least 2 blocks when possible.
    if gen == 7 and T >= 32:
        tm_eff = min(tm_eff, _round_up((T + 1) // 2, 16))

    T_pad = _round_up(T, tm_eff)
    if T_pad != T:
        # Zero rows are harmless: silu(0)*0 @ Wd == 0; sliced off below.
        x2d = jnp.pad(x2d, ((0, T_pad - T), (0, 0)))

    vmem_limit = int(min(max(_vmem_budget(tm_eff, th_eff, dim, x2d.dtype.itemsize),
                             32 << 20),
                         cap_eff))

    y2d = _swiglu_pallas(x2d, w_gate, w_up, w_down, tm_eff, th_eff, vmem_limit)
    return y2d[:T].reshape(x.shape)


# ---------------------------------------------------------------------------
# Parameter construction (matches the PyTorch module's init)
# ---------------------------------------------------------------------------
def _trunc_normal(key, shape, std):
    # matches nn.init.trunc_normal_(mean=0, std=std, a=-3*std, b=3*std)
    return std * jax.random.truncated_normal(key, -3.0, 3.0, shape, jnp.float32)


def make_swiglu_params(key, dim, hidden_dim=None, multiple_of=128):
    # multiple_of defaults to 128 so hidden is lane-aligned (dense vregs, unmasked stores).
    if hidden_dim is None:
        hidden_dim = 4 * dim
        hidden_dim = int(2 * hidden_dim / 3)
        hidden_dim = multiple_of * ((hidden_dim + multiple_of - 1) // multiple_of)
    k_up, k_gate, k_down = jax.random.split(key, 3)
    in_std = dim ** (-0.5)
    out_std = hidden_dim ** (-0.5)
    # stored already transposed: gate/up [dim, hidden], down [hidden, dim]
    w_gate = _trunc_normal(k_gate, (dim, hidden_dim), in_std)
    w_up = _trunc_normal(k_up, (dim, hidden_dim), in_std)
    w_down = _trunc_normal(k_down, (hidden_dim, dim), out_std)
    return w_gate, w_up, w_down, hidden_dim


def prepare_swiglu_weights(w_gate, w_up, w_down):
    """One-time (load-time) cast to bf16 so the forward never relays weights in HBM."""
    return (w_gate.astype(jnp.bfloat16),
            w_up.astype(jnp.bfloat16),
            w_down.astype(jnp.bfloat16))


# ---------------------------------------------------------------------------
# Demo / self-test
# ---------------------------------------------------------------------------
if __name__ == "__main__":
    key = jax.random.PRNGKey(0)
    k_x, k_w = jax.random.split(key)

    batch, seq, dim = 2, 8, 128
    w_gate, w_up, w_down, hidden = make_swiglu_params(k_w, dim)  # hidden = 384

    # Prepare (cast) weights once, outside the forward path.
    wg_b, wu_b, wd_b = prepare_swiglu_weights(w_gate, w_up, w_down)
    wg_b, wu_b, wd_b = jax.block_until_ready((wg_b, wu_b, wd_b))

    x = jax.random.normal(k_x, (batch, seq, dim), jnp.float32)

    y = swiglu_forward(x, wg_b, wu_b, wd_b)
    y = jax.block_until_ready(y)

    # Reference in plain JAX with the same bf16 input/weight rounding and f32 accumulation.
    x2 = x.reshape(-1, dim).astype(jnp.bfloat16).astype(jnp.float32)
    wg = wg_b.astype(jnp.float32)
    wu = wu_b.astype(jnp.float32)
    wd = wd_b.astype(jnp.float32)
    g = x2 @ wg
    u = x2 @ wu
    h = (g * jax.nn.sigmoid(g)) * u
    ref = (h.astype(jnp.bfloat16).astype(jnp.float32) @ wd).reshape(batch, seq, dim)

    assert y.shape == (batch, seq, dim)
    assert y.dtype == x.dtype
    err = float(jnp.max(jnp.abs(y - ref)))
    assert jnp.allclose(y, ref, atol=2e-2, rtol=2e-2), f"max abs err {err}"

    print("KERNEL_OK")
</pallas_src>

<mosaic_0001>
module attributes {stable_mosaic.version = 11 : i64} {
  func.func @_swiglu_kernel(%arg0: i32, %arg1: i32, %arg2: memref<16x128xbf16, #tpu.memory_space<vmem>>, %arg3: memref<128x384xbf16, #tpu.memory_space<vmem>>, %arg4: memref<128x384xbf16, #tpu.memory_space<vmem>>, %arg5: memref<384x128xbf16, #tpu.memory_space<vmem>>, %arg6: memref<16x128xf32, #tpu.memory_space<vmem>>, %arg7: memref<16x128xf32, #tpu.memory_space<vmem>>) attributes {dimension_semantics = [#tpu.dimension_semantics<parallel>, #tpu.dimension_semantics<arbitrary>], iteration_bounds = array<i64: 1, 1>, scalar_prefetch = 0 : i64, scratch_operands = 1 : i64, tpu.core_type = #tpu.core_type<tc>, window_params = [{transform_indices = @transform_0, window_bounds = array<i64: 16, 128>}, {transform_indices = @transform_1, window_bounds = array<i64: 128, 384>}, {transform_indices = @transform_2, window_bounds = array<i64: 128, 384>}, {transform_indices = @transform_3, window_bounds = array<i64: 384, 128>}, {transform_indices = @transform_4, window_bounds = array<i64: 16, 128>}]} {
    %c0_i32 = arith.constant 0 : i32
    %0 = arith.cmpi eq, %arg1, %c0_i32 : i32
    %1 = arith.extui %0 : i1 to i32
    %c0_i32_0 = arith.constant 0 : i32
    %2 = arith.cmpi ne, %1, %c0_i32_0 : i32
    scf.if %2 {
      %cst_17 = arith.constant 0.000000e+00 : f32
      %24 = vector.broadcast %cst_17 : f32 to vector<16x128xf32>
      %c0_18 = arith.constant 0 : index
      %c0_19 = arith.constant 0 : index
      %25 = vector.load %arg7[%c0_18, %c0_19] : memref<16x128xf32, #tpu.memory_space<vmem>>, vector<16x128xf32>
      tpu.vector_store %arg7[%c0_18, %c0_19], %24 {strides = array<i32>} : memref<16x128xf32, #tpu.memory_space<vmem>>, vector<16x128xf32>,
    } else {
    }
    %c0 = arith.constant 0 : index
    %c0_1 = arith.constant 0 : index
    %3 = vector.load %arg2[%c0, %c0_1] : memref<16x128xbf16, #tpu.memory_space<vmem>>, vector<16x128xbf16>
    %c0_2 = arith.constant 0 : index
    %c0_3 = arith.constant 0 : index
    %4 = vector.load %arg3[%c0_2, %c0_3] : memref<128x384xbf16, #tpu.memory_space<vmem>>, vector<128x384xbf16>
    %cst = arith.constant dense<0.000000e+00> : vector<16x384xf32>
    %5 = tpu.matmul %3, %4, %cst {dimension_numbers = #tpu.dot_dimension_numbers<[1], [0], [0], [1], [0, 0, 1, 1], [], []>} : vector<16x128xbf16>, vector<128x384xbf16>, vector<16x384xf32> -> vector<16x384xf32>
    %c0_4 = arith.constant 0 : index
    %c0_5 = arith.constant 0 : index
    %6 = vector.load %arg4[%c0_4, %c0_5] : memref<128x384xbf16, #tpu.memory_space<vmem>>, vector<128x384xbf16>
    %cst_6 = arith.constant dense<0.000000e+00> : vector<16x384xf32>
    %7 = tpu.matmul %3, %6, %cst_6 {dimension_numbers = #tpu.dot_dimension_numbers<[1], [0], [0], [1], [0, 0, 1, 1], [], []>} : vector<16x128xbf16>, vector<128x384xbf16>, vector<16x384xf32> -> vector<16x384xf32>
    %8 = arith.negf %5 : vector<16x384xf32>
    %9 = math.exp %8 : vector<16x384xf32>
    %cst_7 = arith.constant 1.000000e+00 : f32
    %10 = vector.broadcast %cst_7 : f32 to vector<16x384xf32>
    %11 = arith.addf %10, %9 : vector<16x384xf32>
    %12 = arith.divf %10, %11 : vector<16x384xf32>
    %13 = arith.mulf %5, %12 : vector<16x384xf32>
    %14 = arith.mulf %13, %7 : vector<16x384xf32>
    %c0_8 = arith.constant 0 : index
    %c0_9 = arith.constant 0 : index
    %15 = vector.load %arg7[%c0_8, %c0_9] : memref<16x128xf32, #tpu.memory_space<vmem>>, vector<16x128xf32>
    %16 = arith.truncf %14 : vector<16x384xf32> to vector<16x384xbf16>
    %c0_10 = arith.constant 0 : index
    %c0_11 = arith.constant 0 : index
    %17 = vector.load %arg5[%c0_10, %c0_11] : memref<384x128xbf16, #tpu.memory_space<vmem>>, vector<384x128xbf16>
    %cst_12 = arith.constant dense<0.000000e+00> : vector<16x128xf32>
    %18 = tpu.matmul %16, %17, %cst_12 {dimension_numbers = #tpu.dot_dimension_numbers<[1], [0], [0], [1], [0, 0, 1, 1], [], []>} : vector<16x384xbf16>, vector<384x128xbf16>, vector<16x128xf32> -> vector<16x128xf32>
    %19 = arith.addf %15, %18 : vector<16x128xf32>
    %c0_13 = arith.constant 0 : index
    %c0_14 = arith.constant 0 : index
    %20 = vector.load %arg7[%c0_13, %c0_14] : memref<16x128xf32, #tpu.memory_space<vmem>>, vector<16x128xf32>
    tpu.vector_store %arg7[%c0_13, %c0_14], %19 {strides = array<i32>} : memref<16x128xf32, #tpu.memory_space<vmem>>, vector<16x128xf32>,
    %c0_i32_15 = arith.constant 0 : i32
    %21 = arith.cmpi eq, %arg1, %c0_i32_15 : i32
    %22 = arith.extui %21 : i1 to i32
    %c0_i32_16 = arith.constant 0 : i32
    %23 = arith.cmpi ne, %22, %c0_i32_16 : i32
    scf.if %23 {
      %c0_17 = arith.constant 0 : index
      %c0_18 = arith.constant 0 : index
      %24 = vector.load %arg7[%c0_17, %c0_18] : memref<16x128xf32, #tpu.memory_space<vmem>>, vector<16x128xf32>
      %c0_19 = arith.constant 0 : index
      %c0_20 = arith.constant 0 : index
      %25 = vector.load %arg6[%c0_19, %c0_20] : memref<16x128xf32, #tpu.memory_space<vmem>>, vector<16x128xf32>
      tpu.vector_store %arg6[%c0_19, %c0_20], %24 {strides = array<i32>} : memref<16x128xf32, #tpu.memory_space<vmem>>, vector<16x128xf32>,
    } else {
    }
    return
  }
  func.func @transform_0(%arg0: i32, %arg1: i32) -> (i32, i32) {
    %c0_i32 = arith.constant 0 : i32
    %c0_i32_0 = arith.constant 0 : i32
    return %arg0, %c0_i32 : i32, i32
  }
  func.func @transform_1(%arg0: i32, %arg1: i32) -> (i32, i32) {
    %c0_i32 = arith.constant 0 : i32
    %c0_i32_0 = arith.constant 0 : i32
    return %c0_i32, %arg1 : i32, i32
  }
  func.func @transform_2(%arg0: i32, %arg1: i32) -> (i32, i32) {
    %c0_i32 = arith.constant 0 : i32
    %c0_i32_0 = arith.constant 0 : i32
    return %c0_i32, %arg1 : i32, i32
  }
  func.func @transform_3(%arg0: i32, %arg1: i32) -> (i32, i32) {
    %c0_i32 = arith.constant 0 : i32
    %c0_i32_0 = arith.constant 0 : i32
    return %arg1, %c0_i32 : i32, i32
  }
  func.func @transform_4(%arg0: i32, %arg1: i32) -> (i32, i32) {
    %c0_i32 = arith.constant 0 : i32
    %c0_i32_0 = arith.constant 0 : i32
    return %arg0, %c0_i32 : i32, i32
  }
}

</mosaic_0001>

<llo_original>
// kernel: _swiglu_pallas.1
$region0: #{_swiglu_pallas.1}
  #allocation0 [shape = 'u32[]', space=smem, size = 0x4, offset = 0x4, fixed_abs, tag = 'smem constant byte address 0x4 - core index']
  #allocation1 [shape = 'u32[144,128]{1,0:T(1,128)}', space=vmem, size = 0x12000, scoped, tag = 'internal scratch']
  #allocation2 [shape = 'f32[16,128]{1,0:T(8,128)}', space=vmem, size = 0x2000, scoped, tag = 'scratch operand']
  %s0 = inlined_call_operand.vmem [shape: bf16[16,128], index: 0, kind: input, shape index: {}]
  %s1 = inlined_call_operand.hbm [shape: bf16[128,384], index: 1, kind: input, shape index: {}]
  %s2 = inlined_call_operand.hbm [shape: bf16[128,384], index: 2, kind: input, shape index: {}]
  %s3 = inlined_call_operand.hbm [shape: bf16[384,128], index: 3, kind: input, shape index: {}]
  %s4 = inlined_call_operand.hbm [shape: f32[16,128], index: 4, kind: output, shape index: {}]
  %s5 = sld [smem:[#allocation0]]
  $region46: #{_swiglu_pallas.1} parent=0
    _
  %s7 = ssub.s32 1, %s5
  %s8 = scalar_select 0, %s7, %s5
  $region1: #{_swiglu_pallas.1} parent=0
    #allocation3 [shape = 'u8[98304]{0}', space=vmem, size = 0x18000, scoped, tag = 'input window, operand 1, single buffered']
    #allocation4 [shape = 's32[1]{0}', space=sflag, size = 0x4, scoped, tag = 'scoped memory for _swiglu_pallas.1']
    #allocation5 [shape = 's32[1]{0}', space=sflag, size = 0x4, scoped, tag = 'scoped memory for _swiglu_pallas.1']
    #allocation6 [shape = 'u8[98304]{0}', space=vmem, size = 0x18000, scoped, tag = 'input window, operand 2, single buffered']
    #allocation7 [shape = 's32[1]{0}', space=sflag, size = 0x4, scoped, tag = 'scoped memory for _swiglu_pallas.1']
    #allocation8 [shape = 'u8[98304]{0}', space=vmem, size = 0x18000, scoped, tag = 'input window, operand 3, single buffered']
    #allocation9 [shape = 'u8[8192]{0}', space=vmem, size = 0x2000, scoped, tag = 'output window, operand 0, single buffered']
    %9 = vsyncpa [#allocation4], 0
    %10 = vsyncpa [#allocation7], 0
    %11 = vsyncpa [#allocation5], 0
    // Predicated region
    $region2: #{_swiglu_pallas.1} parent=1 // pred_check
      _
    $region3: #{_swiglu_pallas.1} parent=1 // pred_check_branch
      %13 = sbr.rel (0) target = $region5
    $region4: #{_swiglu_pallas.1} parent=1 // pred_region
      _
    $region5: #{_swiglu_pallas.1} parent=1 // pred_fallthru
      _
    // Predicated region
    $region6: #{_swiglu_pallas.1} parent=1 // pred_check
      _
    $region7: #{_swiglu_pallas.1} parent=1 // pred_check_branch
      %15 = sbr.rel (0) target = $region9
    $region8: #{_swiglu_pallas.1} parent=1 // pred_region
      %s17 = ssub.s32 3072, 3072
      %18 = vsyncadd [#allocation4], %s17
      %s19 = sshll.u32 [#allocation3], 4
      %s20 = int_to_ptr.vmem [resolvable:$true] %s19
      %25 = dma.hbm_to_vmem [thread:$0]  %s1, 3072, %s20, [#allocation4], 192, 192, 12
    $region9: #{_swiglu_pallas.1} parent=1 // pred_fallthru
      _
    // Predicated region
    $region10: #{_swiglu_pallas.1} parent=1 // pred_check
      _
    $region11: #{_swiglu_pallas.1} parent=1 // pred_check_branch
      %27 = sbr.rel (0) target = $region13
    $region12: #{_swiglu_pallas.1} parent=1 // pred_region
      %s29 = ssub.s32 3072, 3072
      %30 = vsyncadd [#allocation7], %s29
      %s31 = sshll.u32 [#allocation6], 4
      %s32 = int_to_ptr.vmem [resolvable:$true] %s31
      %37 = dma.hbm_to_vmem [thread:$0]  %s2, 3072, %s32, [#allocation7], 192, 192, 12
    $region13: #{_swiglu_pallas.1} parent=1 // pred_fallthru
      _
    // Predicated region
    $region14: #{_swiglu_pallas.1} parent=1 // pred_check
      _
    $region15: #{_swiglu_pallas.1} parent=1 // pred_check_branch
      %39 = sbr.rel (0) target = $region17
    $region16: #{_swiglu_pallas.1} parent=1 // pred_region
      %s41 = ssub.s32 3072, 3072
      %42 = vsyncadd [#allocation7], %s41
      %s43 = sshll.u32 [#allocation8], 4
      %s44 = int_to_ptr.vmem [resolvable:$true] %s43
      %49 = dma.hbm_to_vmem [thread:$0]  %s3, 3072, %s44, [#allocation7], 64, 64, 4
    $region17: #{_swiglu_pallas.1} parent=1 // pred_fallthru
      _
    // Predicated region
    $region18: #{_swiglu_pallas.1} parent=1 // pred_check
      _
    $region19: #{_swiglu_pallas.1} parent=1 // pred_check_branch
      %51 = sbr.rel (0) target = $region21
    $region20: #{_swiglu_pallas.1} parent=1 // pred_region
      %52 = dma.done [#allocation4], 3072
    $region21: #{_swiglu_pallas.1} parent=1 // pred_fallthru
      _
    // Predicated region
    $region22: #{_swiglu_pallas.1} parent=1 // pred_check
      _
    $region23: #{_swiglu_pallas.1} parent=1 // pred_check_branch
      %54 = sbr.rel (0) target = $region25
    $region24: #{_swiglu_pallas.1} parent=1 // pred_region
      %55 = dma.done [#allocation7], 3072
    $region25: #{_swiglu_pallas.1} parent=1 // pred_fallthru
      _
    // Predicated region
    $region26: #{_swiglu_pallas.1} parent=1 // pred_check
      _
    $region27: #{_swiglu_pallas.1} parent=1 // pred_check_branch
      %57 = sbr.rel (0) target = $region29
    $region28: #{_swiglu_pallas.1} parent=1 // pred_region
      %58 = dma.done [#allocation7], 3072
    $region29: #{_swiglu_pallas.1} parent=1 // pred_fallthru
      _
    %p60 = scmp.eq.s32.totalorder 0, 0
    // Predicated region
    $region30: #{_swiglu_pallas.1} parent=1 // pred_check
      %p61 = pneg %p60
    $region31: #{_swiglu_pallas.1} parent=1 // pred_check_branch
      %63 = sbr.rel (%p61) target = $region33
    $region32: #{_swiglu_pallas.1} parent=1 // pred_region
      %64 = vst [vmem:[#allocation2] sm:$0xff] 0.0
      %65 = vst [vmem:[#allocation2 + $0x8] sm:$0xff] 0.0
    $region33: #{_swiglu_pallas.1} parent=1 // pred_fallthru
      _
    %v66 = vld [vmem:[%s0] sm:$0xf]
    %v67 = vld [vmem:[%s0 + $0x4] sm:$0xf]
    %v68 = vld [vmem:[#allocation3] sm:$0xff]
    %v69 = vld [vmem:[#allocation3 + $0x8] sm:$0xf]
    %v70 = vld [vmem:[#allocation3 + $0xc] sm:$0xff]
    %v71 = vld [vmem:[#allocation3 + $0x14] sm:$0xf]
    %v72 = vld [vmem:[#allocation3 + $0x18] sm:$0xff]
    %v73 = vld [vmem:[#allocation3 + $0x20] sm:$0xf]
    %v74 = vld [vmem:[#allocation3 + $0x24] sm:$0xff]
    %v75 = vld [vmem:[#allocation3 + $0x2c] sm:$0xf]
    %v76 = vld [vmem:[#allocation3 + $0x30] sm:$0xff]
    %v77 = vld [vmem:[#allocation3 + $0x38] sm:$0xf]
    %v78 = vld [vmem:[#allocation3 + $0x3c] sm:$0xff]
    %v79 = vld [vmem:[#allocation3 + $0x44] sm:$0xf]
    %v80 = vld [vmem:[#allocation3 + $0x48] sm:$0xff]
    %v81 = vld [vmem:[#allocation3 + $0x50] sm:$0xf]
    %v82 = vld [vmem:[#allocation3 + $0x54] sm:$0xff]
    %v83 = vld [vmem:[#allocation3 + $0x5c] sm:$0xf]
    %v84 = vld [vmem:[#allocation3 + $0x60] sm:$0xff]
    %v85 = vld [vmem:[#allocation3 + $0x68] sm:$0xf]
    %v86 = vld [vmem:[#allocation3 + $0x6c] sm:$0xff]
    %v87 = vld [vmem:[#allocation3 + $0x74] sm:$0xf]
    %v88 = vld [vmem:[#allocation3 + $0x78] sm:$0xff]
    %v89 = vld [vmem:[#allocation3 + $0x80] sm:$0xf]
    %v90 = vld [vmem:[#allocation3 + $0x84] sm:$0xff]
    %v91 = vld [vmem:[#allocation3 + $0x8c] sm:$0xf]
    %v92 = vld [vmem:[#allocation3 + $0x90] sm:$0xff]
    %v93 = vld [vmem:[#allocation3 + $0x98] sm:$0xf]
    %v94 = vld [vmem:[#allocation3 + $0x9c] sm:$0xff]
    %v95 = vld [vmem:[#allocation3 + $0xa4] sm:$0xf]
    %v96 = vld [vmem:[#allocation3 + $0xa8] sm:$0xff]
    %v97 = vld [vmem:[#allocation3 + $0xb0] sm:$0xf]
    %v98 = vld [vmem:[#allocation3 + $0xb4] sm:$0xff]
    %v99 = vld [vmem:[#allocation3 + $0xbc] sm:$0xf]
    %v102 = vunpack.c.l.b16 %v66
    %v103 = vunpack.c.l.b16 %v67
    %v104 = vpack.c.b16 %v103, %v102
    %v138 = vunpack.c.l.b16 %v68
    %v139 = vunpack.c.h.b16 %v68
    %v140 = vunpack.c.l.b16 %v69
    %v141 = vunpack.c.l.b16 %v70
    %v142 = vunpack.c.h.b16 %v70
    %v143 = vunpack.c.l.b16 %v71
    %v144 = vunpack.c.l.b16 %v72
    %v145 = vunpack.c.h.b16 %v72
    %v146 = vunpack.c.l.b16 %v73
    %v147 = vunpack.c.l.b16 %v74
    %v148 = vunpack.c.h.b16 %v74
    %v149 = vunpack.c.l.b16 %v75
    %v150 = vunpack.c.l.b16 %v76
    %v151 = vunpack.c.h.b16 %v76
    %v152 = vunpack.c.l.b16 %v77
    %v153 = vunpack.c.l.b16 %v78
    %v154 = vunpack.c.h.b16 %v78
    %v155 = vunpack.c.l.b16 %v79
    %v156 = vunpack.c.l.b16 %v80
    %v157 = vunpack.c.h.b16 %v80
    %v158 = vunpack.c.l.b16 %v81
    %v159 = vunpack.c.l.b16 %v82
    %v160 = vunpack.c.h.b16 %v82
    %v161 = vunpack.c.l.b16 %v83
    %v162 = vunpack.c.l.b16 %v84
    %v163 = vunpack.c.h.b16 %v84
    %v164 = vunpack.c.l.b16 %v85
    %v165 = vunpack.c.l.b16 %v86
    %v166 = vunpack.c.h.b16 %v86
    %v167 = vunpack.c.l.b16 %v87
    %v168 = vunpack.c.l.b16 %v88
    %v169 = vunpack.c.h.b16 %v88
    %v170 = vunpack.c.l.b16 %v89
    %v171 = vunpack.c.l.b16 %v90
    %v172 = vunpack.c.h.b16 %v90
    %v173 = vunpack.c.l.b16 %v91
    %v174 = vunpack.c.l.b16 %v92
    %v175 = vunpack.c.h.b16 %v92
    %v176 = vunpack.c.l.b16 %v93
    %v177 = vunpack.c.l.b16 %v94
    %v178 = vunpack.c.h.b16 %v94
    %v179 = vunpack.c.l.b16 %v95
    %v180 = vunpack.c.l.b16 %v96
    %v181 = vunpack.c.h.b16 %v96
    %v182 = vunpack.c.l.b16 %v97
    %v183 = vunpack.c.l.b16 %v98
    %v184 = vunpack.c.h.b16 %v98
    %v185 = vunpack.c.l.b16 %v99
    %v186 = vpack.c.b16 %v141, %v138
    %v187 = vpack.c.b16 %v142, %v139
    %v188 = vpack.c.b16 %v143, %v140
    %v189 = vpack.c.b16 %v147, %v144
    %v190 = vpack.c.b16 %v148, %v145
    %v191 = vpack.c.b16 %v149, %v146
    %v192 = vpack.c.b16 %v153, %v150
    %v193 = vpack.c.b16 %v154, %v151
    %v194 = vpack.c.b16 %v155, %v152
    %v195 = vpack.c.b16 %v159, %v156
    %v196 = vpack.c.b16 %v160, %v157
    %v197 = vpack.c.b16 %v161, %v158
    %v198 = vpack.c.b16 %v165, %v162
    %v199 = vpack.c.b16 %v166, %v163
    %v200 = vpack.c.b16 %v167, %v164
    %v201 = vpack.c.b16 %v171, %v168
    %v202 = vpack.c.b16 %v172, %v169
    %v203 = vpack.c.b16 %v173, %v170
    %v204 = vpack.c.b16 %v177, %v174
    %v205 = vpack.c.b16 %v178, %v175
    %v206 = vpack.c.b16 %v179, %v176
    %v207 = vpack.c.b16 %v183, %v180
    %v208 = vpack.c.b16 %v184, %v181
    %v209 = vpack.c.b16 %v185, %v182
    %234 = vmatprep.subr.bf16.mxu0 %v208
    %235 = vmatpush1.bf16.msra.mxu0 %v207
    %236 = vmatprep.subr.bf16.mxu0 %v205
    %237 = vmatpush1.bf16.msra.mxu0 %v204
    %238 = vmatprep.subr.bf16.mxu0 %v202
    %239 = vmatpush1.bf16.msra.mxu0 %v201
    %240 = vmatprep.subr.bf16.mxu0 %v199
    %241 = vmatpush1.bf16.msra.mxu0 %v198
    %242 = vmatprep.subr.bf16.mxu0 %v196
    %243 = vmatpush1.bf16.msra.mxu0 %v195
    %244 = vmatprep.subr.bf16.mxu0 %v193
    %245 = vmatpush1.bf16.msra.mxu0 %v192
    %246 = vmatprep.subr.bf16.mxu0 %v190
    %247 = vmatpush1.bf16.msra.mxu0 %v189
    %248 = vmatprep.subr.bf16.mxu0 %v187
    %249 = vmatpush1.bf16.msra.mxu0 %v186
    %250 = vmatprep.subr.bf16.mxu0 0
    %251 = vmatpush2.bf16.msra.mxu0 0
    %252 = vmatprep.subr.bf16.mxu0 0
    %253 = vmatpush2.bf16.msra.mxu0 0
    %254 = vmatprep.subr.bf16.mxu0 0
    %255 = vmatpush2.bf16.msra.mxu0 0
    %256 = vmatprep.subr.bf16.mxu0 0
    %257 = vmatpush2.bf16.msra.mxu0 0
    %258 = vmatprep.subr.bf16.mxu0 0
    %259 = vmatpush2.bf16.msra.mxu0 0
    %260 = vmatprep.subr.bf16.mxu0 0
    %261 = vmatpush2.bf16.msra.mxu0 0
    %262 = vmatprep.subr.bf16.mxu0 0
    %263 = vmatpush2.bf16.msra.mxu0 0
    %264 = vmatprep.subr.bf16.mxu0 0
    %265 = vmatpush2.bf16.msra.mxu0 0
    %266 = vmatprep.mubr.bf16.mxu0 0
    %267 = vmatmul.mubr.bf16.gmra.mxu0 %v104
    %v268 = vpop.f32.mrf.mxu0
    %v269 = vadd.f32 0.0, %v268
    %v270 = vpop.f32.mrf.mxu0
    %v271 = vadd.f32 0.0, %v270
    %v272 = vpop.f32.mrf.mxu0
    %v273 = vadd.f32 0.0, %v272
    %v274 = vpop.f32.mrf.mxu0
    %v275 = vadd.f32 0.0, %v274
    %276 = vdwg.mxu0
    %277 = vmatprep.subr.bf16.mxu0 0
    %278 = vmatpush1.bf16.msra.mxu0 %v209
    %279 = vmatprep.subr.bf16.mxu0 0
    %280 = vmatpush1.bf16.msra.mxu0 %v206
    %281 = vmatprep.subr.bf16.mxu0 0
    %282 = vmatpush1.bf16.msra.mxu0 %v203
    %283 = vmatprep.subr.bf16.mxu0 0
    %284 = vmatpush1.bf16.msra.mxu0 %v200
    %285 = vmatprep.subr.bf16.mxu0 0
    %286 = vmatpush1.bf16.msra.mxu0 %v197
    %287 = vmatprep.subr.bf16.mxu0 0
    %288 = vmatpush1.bf16.msra.mxu0 %v194
    %289 = vmatprep.subr.bf16.mxu0 0
    %290 = vmatpush1.bf16.msra.mxu0 %v191
    %291 = vmatprep.subr.bf16.mxu0 0
    %292 = vmatpush1.bf16.msra.mxu0 %v188
    %293 = vmatprep.subr.bf16.mxu0 0
    %294 = vmatpush2.bf16.msra.mxu0 0
    %295 = vmatprep.subr.bf16.mxu0 0
    %296 = vmatpush2.bf16.msra.mxu0 0
    %297 = vmatprep.subr.bf16.mxu0 0
    %298 = vmatpush2.bf16.msra.mxu0 0
    %299 = vmatprep.subr.bf16.mxu0 0
    %300 = vmatpush2.bf16.msra.mxu0 0
    %301 = vmatprep.subr.bf16.mxu0 0
    %302 = vmatpush2.bf16.msra.mxu0 0
    %303 = vmatprep.subr.bf16.mxu0 0
    %304 = vmatpush2.bf16.msra.mxu0 0
    %305 = vmatprep.subr.bf16.mxu0 0
    %306 = vmatpush2.bf16.msra.mxu0 0
    %307 = vmatprep.subr.bf16.mxu0 0
    %308 = vmatpush2.bf16.msra.mxu0 0
    %309 = vmatprep.mubr.bf16.mxu0 0
    %310 = vmatmul.mubr.bf16.gmra.mxu0 %v104
    %v311 = vpop.f32.mrf.mxu0
    %v312 = vadd.f32 0.0, %v311
    %v313 = vpop.f32.mrf.mxu0
    %v314 = vpop.f32.mrf.mxu0
    %v315 = vadd.f32 0.0, %v314
    %v316 = vpop.f32.mrf.mxu0
    %317 = vdwg.mxu0
    %v318 = vld [vmem:[#allocation6] sm:$0xff]
    %v319 = vld [vmem:[#allocation6 + $0x8] sm:$0xf]
    %v320 = vld [vmem:[#allocation6 + $0xc] sm:$0xff]
    %v321 = vld [vmem:[#allocation6 + $0x14] sm:$0xf]
    %v322 = vld [vmem:[#allocation6 + $0x18] sm:$0xff]
    %v323 = vld [vmem:[#allocation6 + $0x20] sm:$0xf]
    %v324 = vld [vmem:[#allocation6 + $0x24] sm:$0xff]
    %v325 = vld [vmem:[#allocation6 + $0x2c] sm:$0xf]
    %v326 = vld [vmem:[#allocation6 + $0x30] sm:$0xff]
    %v327 = vld [vmem:[#allocation6 + $0x38] sm:$0xf]
    %v328 = vld [vmem:[#allocation6 + $0x3c] sm:$0xff]
    %v329 = vld [vmem:[#allocation6 + $0x44] sm:$0xf]
    %v330 = vld [vmem:[#allocation6 + $0x48] sm:$0xff]
    %v331 = vld [vmem:[#allocation6 + $0x50] sm:$0xf]
    %v332 = vld [vmem:[#allocation6 + $0x54] sm:$0xff]
    %v333 = vld [vmem:[#allocation6 + $0x5c] sm:$0xf]
    %v334 = vld [vmem:[#allocation6 + $0x60] sm:$0xff]
    %v335 = vld [vmem:[#allocation6 + $0x68] sm:$0xf]
    %v336 = vld [vmem:[#allocation6 + $0x6c] sm:$0xff]
    %v337 = vld [vmem:[#allocation6 + $0x74] sm:$0xf]
    %v338 = vld [vmem:[#allocation6 + $0x78] sm:$0xff]
    %v339 = vld [vmem:[#allocation6 + $0x80] sm:$0xf]
    %v340 = vld [vmem:[#allocation6 + $0x84] sm:$0xff]
    %v341 = vld [vmem:[#allocation6 + $0x8c] sm:$0xf]
    %v342 = vld [vmem:[#allocation6 + $0x90] sm:$0xff]
    %v343 = vld [vmem:[#allocation6 + $0x98] sm:$0xf]
    %v344 = vld [vmem:[#allocation6 + $0x9c] sm:$0xff]
    %v345 = vld [vmem:[#allocation6 + $0xa4] sm:$0xf]
    %v346 = vld [vmem:[#allocation6 + $0xa8] sm:$0xff]
    %v347 = vld [vmem:[#allocation6 + $0xb0] sm:$0xf]
    %v348 = vld [vmem:[#allocation6 + $0xb4] sm:$0xff]
    %v349 = vld [vmem:[#allocation6 + $0xbc] sm:$0xf]
    %v382 = vunpack.c.l.b16 %v318
    %v383 = vunpack.c.h.b16 %v318
    %v384 = vunpack.c.l.b16 %v319
    %v385 = vunpack.c.l.b16 %v320
    %v386 = vunpack.c.h.b16 %v320
    %v387 = vunpack.c.l.b16 %v321
    %v388 = vunpack.c.l.b16 %v322
    %v389 = vunpack.c.h.b16 %v322
    %v390 = vunpack.c.l.b16 %v323
    %v391 = vunpack.c.l.b16 %v324
    %v392 = vunpack.c.h.b16 %v324
    %v393 = vunpack.c.l.b16 %v325
    %v394 = vunpack.c.l.b16 %v326
    %v395 = vunpack.c.h.b16 %v326
    %v396 = vunpack.c.l.b16 %v327
    %v397 = vunpack.c.l.b16 %v328
    %v398 = vunpack.c.h.b16 %v328
    %v399 = vunpack.c.l.b16 %v329
    %v400 = vunpack.c.l.b16 %v330
    %v401 = vunpack.c.h.b16 %v330
    %v402 = vunpack.c.l.b16 %v331
    %v403 = vunpack.c.l.b16 %v332
    %v404 = vunpack.c.h.b16 %v332
    %v405 = vunpack.c.l.b16 %v333
    %v406 = vunpack.c.l.b16 %v334
    %v407 = vunpack.c.h.b16 %v334
    %v408 = vunpack.c.l.b16 %v335
    %v409 = vunpack.c.l.b16 %v336
    %v410 = vunpack.c.h.b16 %v336
    %v411 = vunpack.c.l.b16 %v337
    %v412 = vunpack.c.l.b16 %v338
    %v413 = vunpack.c.h.b16 %v338
    %v414 = vunpack.c.l.b16 %v339
    %v415 = vunpack.c.l.b16 %v340
    %v416 = vunpack.c.h.b16 %v340
    %v417 = vunpack.c.l.b16 %v341
    %v418 = vunpack.c.l.b16 %v342
    %v419 = vunpack.c.h.b16 %v342
    %v420 = vunpack.c.l.b16 %v343
    %v421 = vunpack.c.l.b16 %v344
    %v422 = vunpack.c.h.b16 %v344
    %v423 = vunpack.c.l.b16 %v345
    %v424 = vunpack.c.l.b16 %v346
    %v425 = vunpack.c.h.b16 %v346
    %v426 = vunpack.c.l.b16 %v347
    %v427 = vunpack.c.l.b16 %v348
    %v428 = vunpack.c.h.b16 %v348
    %v429 = vunpack.c.l.b16 %v349
    %v430 = vpack.c.b16 %v385, %v382
    %v431 = vpack.c.b16 %v386, %v383
    %v432 = vpack.c.b16 %v387, %v384
    %v433 = vpack.c.b16 %v391, %v388
    %v434 = vpack.c.b16 %v392, %v389
    %v435 = vpack.c.b16 %v393, %v390
    %v436 = vpack.c.b16 %v397, %v394
    %v437 = vpack.c.b16 %v398, %v395
    %v438 = vpack.c.b16 %v399, %v396
    %v439 = vpack.c.b16 %v403, %v400
    %v440 = vpack.c.b16 %v404, %v401
    %v441 = vpack.c.b16 %v405, %v402
    %v442 = vpack.c.b16 %v409, %v406
    %v443 = vpack.c.b16 %v410, %v407
    %v444 = vpack.c.b16 %v411, %v408
    %v445 = vpack.c.b16 %v415, %v412
    %v446 = vpack.c.b16 %v416, %v413
    %v447 = vpack.c.b16 %v417, %v414
    %v448 = vpack.c.b16 %v421, %v418
    %v449 = vpack.c.b16 %v422, %v419
    %v450 = vpack.c.b16 %v423, %v420
    %v451 = vpack.c.b16 %v427, %v424
    %v452 = vpack.c.b16 %v428, %v425
    %v453 = vpack.c.b16 %v429, %v426
    %478 = vmatprep.subr.bf16.mxu0 %v452
    %479 = vmatpush1.bf16.msra.mxu0 %v451
    %480 = vmatprep.subr.bf16.mxu0 %v449
    %481 = vmatpush1.bf16.msra.mxu0 %v448
    %482 = vmatprep.subr.bf16.mxu0 %v446
    %483 = vmatpush1.bf16.msra.mxu0 %v445
    %484 = vmatprep.subr.bf16.mxu0 %v443
    %485 = vmatpush1.bf16.msra.mxu0 %v442
    %486 = vmatprep.subr.bf16.mxu0 %v440
    %487 = vmatpush1.bf16.msra.mxu0 %v439
    %488 = vmatprep.subr.bf16.mxu0 %v437
    %489 = vmatpush1.bf16.msra.mxu0 %v436
    %490 = vmatprep.subr.bf16.mxu0 %v434
    %491 = vmatpush1.bf16.msra.mxu0 %v433
    %492 = vmatprep.subr.bf16.mxu0 %v431
    %493 = vmatpush1.bf16.msra.mxu0 %v430
    %494 = vmatprep.subr.bf16.mxu0 0
    %495 = vmatpush2.bf16.msra.mxu0 0
    %496 = vmatprep.subr.bf16.mxu0 0
    %497 = vmatpush2.bf16.msra.mxu0 0
    %498 = vmatprep.subr.bf16.mxu0 0
    %499 = vmatpush2.bf16.msra.mxu0 0
    %500 = vmatprep.subr.bf16.mxu0 0
    %501 = vmatpush2.bf16.msra.mxu0 0
    %502 = vmatprep.subr.bf16.mxu0 0
    %503 = vmatpush2.bf16.msra.mxu0 0
    %504 = vmatprep.subr.bf16.mxu0 0
    %505 = vmatpush2.bf16.msra.mxu0 0
    %506 = vmatprep.subr.bf16.mxu0 0
    %507 = vmatpush2.bf16.msra.mxu0 0
    %508 = vmatprep.subr.bf16.mxu0 0
    %509 = vmatpush2.bf16.msra.mxu0 0
    %510 = vmatprep.mubr.bf16.mxu0 0
    %511 = vmatmul.mubr.bf16.gmra.mxu0 %v104
    %v512 = vpop.f32.mrf.mxu0
    %v513 = vadd.f32 0.0, %v512
    %v514 = vpop.f32.mrf.mxu0
    %v515 = vadd.f32 0.0, %v514
    %v516 = vpop.f32.mrf.mxu0
    %v517 = vadd.f32 0.0, %v516
    %v518 = vpop.f32.mrf.mxu0
    %v519 = vadd.f32 0.0, %v518
    %520 = vdwg.mxu0
    %521 = vmatprep.subr.bf16.mxu0 0
    %522 = vmatpush1.bf16.msra.mxu0 %v453
    %523 = vmatprep.subr.bf16.mxu0 0
    %524 = vmatpush1.bf16.msra.mxu0 %v450
    %525 = vmatprep.subr.bf16.mxu0 0
    %526 = vmatpush1.bf16.msra.mxu0 %v447
    %527 = vmatprep.subr.bf16.mxu0 0
    %528 = vmatpush1.bf16.msra.mxu0 %v444
    %529 = vmatprep.subr.bf16.mxu0 0
    %530 = vmatpush1.bf16.msra.mxu0 %v441
    %531 = vmatprep.subr.bf16.mxu0 0
    %532 = vmatpush1.bf16.msra.mxu0 %v438
    %533 = vmatprep.subr.bf16.mxu0 0
    %534 = vmatpush1.bf16.msra.mxu0 %v435
    %535 = vmatprep.subr.bf16.mxu0 0
    %536 = vmatpush1.bf16.msra.mxu0 %v432
    %537 = vmatprep.subr.bf16.mxu0 0
    %538 = vmatpush2.bf16.msra.mxu0 0
    %539 = vmatprep.subr.bf16.mxu0 0
    %540 = vmatpush2.bf16.msra.mxu0 0
    %541 = vmatprep.subr.bf16.mxu0 0
    %542 = vmatpush2.bf16.msra.mxu0 0
    %543 = vmatprep.subr.bf16.mxu0 0
    %544 = vmatpush2.bf16.msra.mxu0 0
    %545 = vmatprep.subr.bf16.mxu0 0
    %546 = vmatpush2.bf16.msra.mxu0 0
    %547 = vmatprep.subr.bf16.mxu0 0
    %548 = vmatpush2.bf16.msra.mxu0 0
    %549 = vmatprep.subr.bf16.mxu0 0
    %550 = vmatpush2.bf16.msra.mxu0 0
    %551 = vmatprep.subr.bf16.mxu0 0
    %552 = vmatpush2.bf16.msra.mxu0 0
    %553 = vmatprep.mubr.bf16.mxu0 0
    %554 = vmatmul.mubr.bf16.gmra.mxu0 %v104
    %v555 = vpop.f32.mrf.mxu0
    %v556 = vadd.f32 0.0, %v555
    %v557 = vpop.f32.mrf.mxu0
    %v558 = vpop.f32.mrf.mxu0
    %v559 = vadd.f32 0.0, %v558
    %v560 = vpop.f32.mrf.mxu0
    %561 = vdwg.mxu0
    %v562 = vxor.u32 %v269, 2147483648
    %v563 = vxor.u32 %v271, 2147483648
    %v564 = vxor.u32 %v312, 2147483648
    %v565 = vxor.u32 %v273, 2147483648
    %v566 = vxor.u32 %v275, 2147483648
    %v567 = vxor.u32 %v315, 2147483648
    %v568 = vmul.f32 %v562, 1.442695
    %v569 = vpow.pop %v568
    %v570 = vmul.f32 %v563, 1.442695
    %v571 = vpow.pop %v570
    %v572 = vmul.f32 %v564, 1.442695
    %v573 = vpow.pop %v572
    %v574 = vmul.f32 %v565, 1.442695
    %v575 = vpow.pop %v574
    %v576 = vmul.f32 %v566, 1.442695
    %v577 = vpow.pop %v576
    %v578 = vmul.f32 %v567, 1.442695
    %v579 = vpow.pop %v578
    %v580 = vadd.f32 %v569, 1.0
    %v581 = vadd.f32 %v571, 1.0
    %v582 = vadd.f32 %v573, 1.0
    %v583 = vadd.f32 %v575, 1.0
    %v584 = vadd.f32 %v577, 1.0
    %v585 = vadd.f32 %v579, 1.0
    %v586 = vrcp.pop %v580
    %v587 = vmul.f32 1.0, %v586
    %v588 = vrcp.pop %v581
    %v589 = vmul.f32 1.0, %v588
    %v590 = vrcp.pop %v582
    %v591 = vmul.f32 1.0, %v590
    %v592 = vrcp.pop %v583
    %v593 = vmul.f32 1.0, %v592
    %v594 = vrcp.pop %v584
    %v595 = vmul.f32 1.0, %v594
    %v596 = vrcp.pop %v585
    %v597 = vmul.f32 1.0, %v596
    %v598 = vmul.f32 %v269, %v587
    %v599 = vmul.f32 %v271, %v589
    %v600 = vmul.f32 %v312, %v591
    %v601 = vmul.f32 %v273, %v593
    %v602 = vmul.f32 %v275, %v595
    %v603 = vmul.f32 %v315, %v597
    %v604 = vmul.f32 %v598, %v513
    %v605 = vmul.f32 %v599, %v515
    %v606 = vmul.f32 %v600, %v556
    %v607 = vmul.f32 %v601, %v517
    %v608 = vmul.f32 %v602, %v519
    %v609 = vmul.f32 %v603, %v559
    %v610 = vld [vmem:[#allocation2] sm:$0xff]
    %v611 = vld [vmem:[#allocation2 + $0x8] sm:$0xff]
    %v612 = vpack.c.bf16 %v607, %v604
    %v613 = vpack.c.bf16 %v608, %v605
    %v614 = vpack.c.bf16 %v609, %v606
    %v615 = vld [vmem:[#allocation8] sm:$0xf]
    %v616 = vld [vmem:[#allocation8 + $0x4] sm:$0xf]
    %v617 = vld [vmem:[#allocation8 + $0x8] sm:$0xf]
    %v618 = vld [vmem:[#allocation8 + $0xc] sm:$0xf]
    %v619 = vld [vmem:[#allocation8 + $0x10] sm:$0xf]
    %v620 = vld [vmem:[#allocation8 + $0x14] sm:$0xf]
    %v621 = vld [vmem:[#allocation8 + $0x18] sm:$0xf]
    %v622 = vld [vmem:[#allocation8 + $0x1c] sm:$0xf]
    %v623 = vld [vmem:[#allocation8 + $0x20] sm:$0xf]
    %v624 = vld [vmem:[#allocation8 + $0x24] sm:$0xf]
    %v625 = vld [vmem:[#allocation8 + $0x28] sm:$0xf]
    %v626 = vld [vmem:[#allocation8 + $0x2c] sm:$0xf]
    %v627 = vld [vmem:[#allocation8 + $0x30] sm:$0xf]
    %v628 = vld [vmem:[#allocation8 + $0x34] sm:$0xf]
    %v629 = vld [vmem:[#allocation8 + $0x38] sm:$0xf]
    %v630 = vld [vmem:[#allocation8 + $0x3c] sm:$0xf]
    %v631 = vld [vmem:[#allocation8 + $0x40] sm:$0xf]
    %v632 = vld [vmem:[#allocation8 + $0x44] sm:$0xf]
    %v633 = vld [vmem:[#allocation8 + $0x48] sm:$0xf]
    %v634 = vld [vmem:[#allocation8 + $0x4c] sm:$0xf]
    %v635 = vld [vmem:[#allocation8 + $0x50] sm:$0xf]
    %v636 = vld [vmem:[#allocation8 + $0x54] sm:$0xf]
    %v637 = vld [vmem:[#allocation8 + $0x58] sm:$0xf]
    %v638 = vld [vmem:[#allocation8 + $0x5c] sm:$0xf]
    %v639 = vld [vmem:[#allocation8 + $0x60] sm:$0xf]
    %v640 = vld [vmem:[#allocation8 + $0x64] sm:$0xf]
    %v641 = vld [vmem:[#allocation8 + $0x68] sm:$0xf]
    %v642 = vld [vmem:[#allocation8 + $0x6c] sm:$0xf]
    %v643 = vld [vmem:[#allocation8 + $0x70] sm:$0xf]
    %v644 = vld [vmem:[#allocation8 + $0x74] sm:$0xf]
    %v645 = vld [vmem:[#allocation8 + $0x78] sm:$0xf]
    %v646 = vld [vmem:[#allocation8 + $0x7c] sm:$0xf]
    %v647 = vld [vmem:[#allocation8 + $0x80] sm:$0xf]
    %v648 = vld [vmem:[#allocation8 + $0x84] sm:$0xf]
    %v649 = vld [vmem:[#allocation8 + $0x88] sm:$0xf]
    %v650 = vld [vmem:[#allocation8 + $0x8c] sm:$0xf]
    %v651 = vld [vmem:[#allocation8 + $0x90] sm:$0xf]
    %v652 = vld [vmem:[#allocation8 + $0x94] sm:$0xf]
    %v653 = vld [vmem:[#allocation8 + $0x98] sm:$0xf]
    %v654 = vld [vmem:[#allocation8 + $0x9c] sm:$0xf]
    %v655 = vld [vmem:[#allocation8 + $0xa0] sm:$0xf]
    %v656 = vld [vmem:[#allocation8 + $0xa4] sm:$0xf]
    %v657 = vld [vmem:[#allocation8 + $0xa8] sm:$0xf]
    %v658 = vld [vmem:[#allocation8 + $0xac] sm:$0xf]
    %v659 = vld [vmem:[#allocation8 + $0xb0] sm:$0xf]
    %v660 = vld [vmem:[#allocation8 + $0xb4] sm:$0xf]
    %v661 = vld [vmem:[#allocation8 + $0xb8] sm:$0xf]
    %v662 = vld [vmem:[#allocation8 + $0xbc] sm:$0xf]
    %v711 = vunpack.c.l.b16 %v615
    %v712 = vunpack.c.l.b16 %v616
    %v713 = vunpack.c.l.b16 %v617
    %v714 = vunpack.c.l.b16 %v618
    %v715 = vunpack.c.l.b16 %v619
    %v716 = vunpack.c.l.b16 %v620
    %v717 = vunpack.c.l.b16 %v621
    %v718 = vunpack.c.l.b16 %v622
    %v719 = vunpack.c.l.b16 %v623
    %v720 = vunpack.c.l.b16 %v624
    %v721 = vunpack.c.l.b16 %v625
    %v722 = vunpack.c.l.b16 %v626
    %v723 = vunpack.c.l.b16 %v627
    %v724 = vunpack.c.l.b16 %v628
    %v725 = vunpack.c.l.b16 %v629
    %v726 = vunpack.c.l.b16 %v630
    %v727 = vunpack.c.l.b16 %v631
    %v728 = vunpack.c.l.b16 %v632
    %v729 = vunpack.c.l.b16 %v633
    %v730 = vunpack.c.l.b16 %v634
    %v731 = vunpack.c.l.b16 %v635
    %v732 = vunpack.c.l.b16 %v636
    %v733 = vunpack.c.l.b16 %v637
    %v734 = vunpack.c.l.b16 %v638
    %v735 = vunpack.c.l.b16 %v639
    %v736 = vunpack.c.l.b16 %v640
    %v737 = vunpack.c.l.b16 %v641
    %v738 = vunpack.c.l.b16 %v642
    %v739 = vunpack.c.l.b16 %v643
    %v740 = vunpack.c.l.b16 %v644
    %v741 = vunpack.c.l.b16 %v645
    %v742 = vunpack.c.l.b16 %v646
    %v743 = vunpack.c.l.b16 %v647
    %v744 = vunpack.c.l.b16 %v648
    %v745 = vunpack.c.l.b16 %v649
    %v746 = vunpack.c.l.b16 %v650
    %v747 = vunpack.c.l.b16 %v651
    %v748 = vunpack.c.l.b16 %v652
    %v749 = vunpack.c.l.b16 %v653
    %v750 = vunpack.c.l.b16 %v654
    %v751 = vunpack.c.l.b16 %v655
    %v752 = vunpack.c.l.b16 %v656
    %v753 = vunpack.c.l.b16 %v657
    %v754 = vunpack.c.l.b16 %v658
    %v755 = vunpack.c.l.b16 %v659
    %v756 = vunpack.c.l.b16 %v660
    %v757 = vunpack.c.l.b16 %v661
    %v758 = vunpack.c.l.b16 %v662
    %v759 = vpack.c.b16 %v712, %v711
    %v760 = vpack.c.b16 %v714, %v713
    %v761 = vpack.c.b16 %v716, %v715
    %v762 = vpack.c.b16 %v718, %v717
    %v763 = vpack.c.b16 %v720, %v719
    %v764 = vpack.c.b16 %v722, %v721
    %v765 = vpack.c.b16 %v724, %v723
    %v766 = vpack.c.b16 %v726, %v725
    %v767 = vpack.c.b16 %v728, %v727
    %v768 = vpack.c.b16 %v730, %v729
    %v769 = vpack.c.b16 %v732, %v731
    %v770 = vpack.c.b16 %v734, %v733
    %v771 = vpack.c.b16 %v736, %v735
    %v772 = vpack.c.b16 %v738, %v737
    %v773 = vpack.c.b16 %v740, %v739
    %v774 = vpack.c.b16 %v742, %v741
    %v775 = vpack.c.b16 %v744, %v743
    %v776 = vpack.c.b16 %v746, %v745
    %v777 = vpack.c.b16 %v748, %v747
    %v778 = vpack.c.b16 %v750, %v749
    %v779 = vpack.c.b16 %v752, %v751
    %v780 = vpack.c.b16 %v754, %v753
    %v781 = vpack.c.b16 %v756, %v755
    %v782 = vpack.c.b16 %v758, %v757
    %807 = vmatprep.subr.bf16.mxu0 0
    %808 = vmatpush1.bf16.msra.mxu0 %v766
    %809 = vmatprep.subr.bf16.mxu0 0
    %810 = vmatpush1.bf16.msra.mxu0 %v765
    %811 = vmatprep.subr.bf16.mxu0 0
    %812 = vmatpush1.bf16.msra.mxu0 %v764
    %813 = vmatprep.subr.bf16.mxu0 0
    %814 = vmatpush1.bf16.msra.mxu0 %v763
    %815 = vmatprep.subr.bf16.mxu0 0
    %816 = vmatpush1.bf16.msra.mxu0 %v762
    %817 = vmatprep.subr.bf16.mxu0 0
    %818 = vmatpush1.bf16.msra.mxu0 %v761
    %819 = vmatprep.subr.bf16.mxu0 0
    %820 = vmatpush1.bf16.msra.mxu0 %v760
    %821 = vmatprep.subr.bf16.mxu0 0
    %822 = vmatpush1.bf16.msra.mxu0 %v759
    %823 = vmatprep.subr.bf16.mxu0 0
    %824 = vmatpush2.bf16.msra.mxu0 %v774
    %825 = vmatprep.subr.bf16.mxu0 0
    %826 = vmatpush2.bf16.msra.mxu0 %v773
    %827 = vmatprep.subr.bf16.mxu0 0
    %828 = vmatpush2.bf16.msra.mxu0 %v772
    %829 = vmatprep.subr.bf16.mxu0 0
    %830 = vmatpush2.bf16.msra.mxu0 %v771
    %831 = vmatprep.subr.bf16.mxu0 0
    %832 = vmatpush2.bf16.msra.mxu0 %v770
    %833 = vmatprep.subr.bf16.mxu0 0
    %834 = vmatpush2.bf16.msra.mxu0 %v769
    %835 = vmatprep.subr.bf16.mxu0 0
    %836 = vmatpush2.bf16.msra.mxu0 %v768
    %837 = vmatprep.subr.bf16.mxu0 0
    %838 = vmatpush2.bf16.msra.mxu0 %v767
    %839 = vmatprep.mubr.bf16.mxu0 %v613
    %840 = vmatmul.mubr.bf16.gmra.mxu0 %v612
    %v841 = vpop.f32.mrf.mxu0
    %v842 = vadd.f32 0.0, %v841
    %v843 = vpop.f32.mrf.mxu0
    %v844 = vpop.f32.mrf.mxu0
    %v845 = vadd.f32 0.0, %v844
    %v846 = vpop.f32.mrf.mxu0
    %847 = vdwg.mxu0
    %848 = vmatprep.subr.bf16.mxu0 0
    %849 = vmatpush1.bf16.msra.mxu0 %v782
    %850 = vmatprep.subr.bf16.mxu0 0
    %851 = vmatpush1.bf16.msra.mxu0 %v781
    %852 = vmatprep.subr.bf16.mxu0 0
    %853 = vmatpush1.bf16.msra.mxu0 %v780
    %854 = vmatprep.subr.bf16.mxu0 0
    %855 = vmatpush1.bf16.msra.mxu0 %v779
    %856 = vmatprep.subr.bf16.mxu0 0
    %857 = vmatpush1.bf16.msra.mxu0 %v778
    %858 = vmatprep.subr.bf16.mxu0 0
    %859 = vmatpush1.bf16.msra.mxu0 %v777
    %860 = vmatprep.subr.bf16.mxu0 0
    %861 = vmatpush1.bf16.msra.mxu0 %v776
    %862 = vmatprep.subr.bf16.mxu0 0
    %863 = vmatpush1.bf16.msra.mxu0 %v775
    %864 = vmatprep.subr.bf16.mxu0 0
    %865 = vmatpush2.bf16.msra.mxu0 0
    %866 = vmatprep.subr.bf16.mxu0 0
    %867 = vmatpush2.bf16.msra.mxu0 0
    %868 = vmatprep.subr.bf16.mxu0 0
    %869 = vmatpush2.bf16.msra.mxu0 0
    %870 = vmatprep.subr.bf16.mxu0 0
    %871 = vmatpush2.bf16.msra.mxu0 0
    %872 = vmatprep.subr.bf16.mxu0 0
    %873 = vmatpush2.bf16.msra.mxu0 0
    %874 = vmatprep.subr.bf16.mxu0 0
    %875 = vmatpush2.bf16.msra.mxu0 0
    %876 = vmatprep.subr.bf16.mxu0 0
    %877 = vmatpush2.bf16.msra.mxu0 0
    %878 = vmatprep.subr.bf16.mxu0 0
    %879 = vmatpush2.bf16.msra.mxu0 0
    %880 = vmatprep.mubr.bf16.mxu0 0
    %881 = vmatmul.mubr.bf16.gmra.mxu0 %v614
    %v882 = vpop.f32.mrf.mxu0
    %v883 = vadd.f32 %v842, %v882
    %v884 = vpop.f32.mrf.mxu0
    %v885 = vpop.f32.mrf.mxu0
    %v886 = vadd.f32 %v845, %v885
    %v887 = vpop.f32.mrf.mxu0
    %888 = vdwg.mxu0
    %v889 = vadd.f32 %v610, %v883
    %v890 = vadd.f32 %v611, %v886
    %891 = vst [vmem:[#allocation2] sm:$0xff] %v889
    %892 = vst [vmem:[#allocation2 + $0x8] sm:$0xff] %v890
    // Predicated region
    $region34: #{_swiglu_pallas.1} parent=1 // pred_check
      %p893 = pneg %p60
    $region35: #{_swiglu_pallas.1} parent=1 // pred_check_branch
      %895 = sbr.rel (%p893) target = $region37
    $region36: #{_swiglu_pallas.1} parent=1 // pred_region
      %v896 = vld [vmem:[#allocation2] sm:$0xff]
      %v897 = vld [vmem:[#allocation2 + $0x8] sm:$0xff]
      %898 = vst [vmem:[#allocation9] sm:$0xff] %v896
      %899 = vst [vmem:[#allocation9 + $0x8] sm:$0xff] %v897
    $region37: #{_swiglu_pallas.1} parent=1 // pred_fallthru
      _
    // Predicated region
    $region38: #{_swiglu_pallas.1} parent=1 // pred_check
      _
    $region39: #{_swiglu_pallas.1} parent=1 // pred_check_branch
      %901 = sbr.rel (0) target = $region41
    $region40: #{_swiglu_pallas.1} parent=1 // pred_region
      %s903 = ssub.s32 256, 256
      %904 = vsyncadd [#allocation5], %s903
      %s905 = sshll.u32 [#allocation9], 4
      %s906 = int_to_ptr.vmem [resolvable:$true] %s905
      %911 = dma.vmem_to_hbm [thread:$0]  %s906, 256, %s4, [#allocation5], 128, 128, 8
    $region41: #{_swiglu_pallas.1} parent=1 // pred_fallthru
      _
    // Predicated region
    $region42: #{_swiglu_pallas.1} parent=1 // pred_check
      _
    $region43: #{_swiglu_pallas.1} parent=1 // pred_check_branch
      %913 = sbr.rel (0) target = $region45
    $region44: #{_swiglu_pallas.1} parent=1 // pred_region
      %914 = dma.done [#allocation5], 256
    $region45: #{_swiglu_pallas.1} parent=1 // pred_fallthru
      _
    %915 = vsyncpa [#allocation4], 1
    %916 = vsyncpa [#allocation7], 1
    %917 = vsyncpa [#allocation5], 1

</llo_original>
